<compile_context>
chip_gen: v7x
topology: tpu7x:2x2x1
jax: 0.10.0
libtpu: 0.0.40
codegen_flags: <defaults>
</compile_context>

<pallas_src>
import functools

import jax
import jax.numpy as jnp
from jax.experimental import pallas as pl
from jax.experimental.pallas import tpu as pltpu


# ---------------------------------------------------------------------------
# Kernel: one MXU matmul (bf16 in, f32 acc) + bias + log_softmax over a
# lane-dense (BM, OUT_PAD) tile.
# ---------------------------------------------------------------------------
def covers_genre_kernel(x_ref, w_ref, b_ref, o_ref):
    # (BM, K) bf16 @ (K, OUT_PAD) bf16 -> f32 accumulate on the MXU.
    y = jnp.dot(x_ref[...], w_ref[...], preferred_element_type=jnp.float32)
    y = y + b_ref[...]                                   # (1, OUT_PAD) f32 bcast

    # log_softmax over the last (lane) axis.  Padded lanes hold -1e30 bias so
    # they never win the max and exp() underflows to exactly 0.
    m = jnp.max(y, axis=-1, keepdims=True)
    z = y - m
    lse = jnp.log(jnp.sum(jnp.exp(z), axis=-1, keepdims=True))
    o_ref[...] = z - lse


# ---------------------------------------------------------------------------
# One-time parameter preparation (hoisted out of the per-call forward).
# Folds Conv2d(pad=1) + Linear into a single affine map and pads the output
# dim to a multiple of 128 lanes.  Returns (w_eff_p bf16, b_eff_p f32).
# ---------------------------------------------------------------------------
def prepare_params(conv_w, conv_b, lin_w, lin_b, H, W):
    """conv_w: (1,C,3,3), conv_b: (1,), lin_w: (OUT, H*W), lin_b: (OUT,)."""
    OUT, HW = lin_w.shape
    assert HW == H * W
    C = conv_w.shape[1]
    K = C * H * W

    # y[b,o] = sum_{c,h,w} x[b,c,h,w] * M[c,h,w,o] + b_eff[o]
    # M[c,h,w,o] = sum_{kh,kw} conv_w[0,c,kh,kw] * L_pad[o, h-kh+2, w-kw+2]
    # where L is lin_w viewed as an (OUT, H, W) image, zero-padded by 1.
    L = lin_w.reshape(OUT, H, W).astype(jnp.float32)
    L_pad = jnp.pad(L, ((0, 0), (1, 1), (1, 1)))                  # (OUT,H+2,W+2)
    cw = conv_w[0].astype(jnp.float32)                            # (C, 3, 3)

    M = jnp.zeros((C, H, W, OUT), jnp.float32)
    for kh in range(3):
        for kw in range(3):
            sh = L_pad[:, 2 - kh:2 - kh + H, 2 - kw:2 - kw + W]   # (OUT, H, W)
            sh = jnp.transpose(sh, (1, 2, 0))                     # (H, W, OUT)
            M = M + cw[:, kh, kw][:, None, None, None] * sh[None]
    w_eff = M.reshape(K, OUT)                                     # (K, OUT) f32
    b_eff = (lin_b.astype(jnp.float32)
             + conv_b.astype(jnp.float32)[0] * lin_w.astype(jnp.float32).sum(1))

    OUT_PAD = pl.cdiv(OUT, 128) * 128
    NEG = jnp.float32(-1e30)
    w_eff_p = (jnp.zeros((K, OUT_PAD), jnp.float32)
               .at[:, :OUT].set(w_eff)
               .astype(jnp.bfloat16))                             # bf16 weight
    b_eff_p = jnp.full((1, OUT_PAD), NEG, jnp.float32).at[0, :OUT].set(b_eff)
    return w_eff_p, b_eff_p


# ---------------------------------------------------------------------------
# Per-call forward: reshape -> bf16 cast -> one pallas_call -> slice.
# ---------------------------------------------------------------------------
@functools.partial(jax.jit, static_argnames=("out_features",))
def covers_genre_forward(x, w_eff_p, b_eff_p, *, out_features):
    """x: (B, C, H, W).  w_eff_p: (C*H*W, OUT_PAD) bf16, b_eff_p: (1, OUT_PAD)
    f32 from prepare_params.  Returns (B, out_features) log-probabilities."""
    B, C, H, W = x.shape
    K = C * H * W
    assert w_eff_p.shape[0] == K
    OUT_PAD = w_eff_p.shape[1]

    # Batch tiling: BM multiple of 16 (bf16 sublane packing), capped at 512
    # rows; once the batch is big enough, use >=2 grid steps so both v7x
    # TensorCores get a tile via dimension_semantics=("parallel",).
    n_steps = max(1, pl.cdiv(B, 512))
    if B >= 64 and n_steps < 2:
        n_steps = 2
    BM = pl.cdiv(pl.cdiv(B, n_steps), 16) * 16
    B_pad = n_steps * BM                                          # pad <= ~16*n

    x_flat = x.reshape(B, K).astype(jnp.bfloat16)                 # halve x bytes
    if B_pad != B:
        x_flat = jnp.pad(x_flat, ((0, B_pad - B), (0, 0)))

    out_full = pl.pallas_call(
        covers_genre_kernel,
        out_shape=jax.ShapeDtypeStruct((B_pad, OUT_PAD), jnp.float32),
        grid_spec=pl.GridSpec(
            grid=(n_steps,),
            in_specs=[
                pl.BlockSpec((BM, K), lambda i: (i, 0)),          # x batch tile
                pl.BlockSpec((K, OUT_PAD), lambda i: (0, 0)),     # weight, resident
                pl.BlockSpec((1, OUT_PAD), lambda i: (0, 0)),     # bias, resident
            ],
            out_specs=pl.BlockSpec((BM, OUT_PAD), lambda i: (i, 0)),
        ),
        compiler_params=pltpu.CompilerParams(
            dimension_semantics=("parallel",),
            vmem_limit_bytes=32 * 1024 * 1024,
        ),
    )(x_flat, w_eff_p, b_eff_p)

    return out_full[:B, :out_features]


def reference_forward(x, conv_w, conv_b, lin_w, lin_b):
    """Pure-JAX f32 reference matching the PyTorch module."""
    out = jax.lax.conv_general_dilated(
        x, conv_w, window_strides=(1, 1), padding="SAME",
        dimension_numbers=("NCHW", "OIHW", "NCHW"))
    out = out + conv_b.reshape(1, 1, 1, 1)
    out = out[:, 0]                              # squeeze(1)
    flat = out.reshape(x.shape[0], -1)           # view(B, H*W)
    y = flat @ lin_w.T + lin_b
    return jax.nn.log_softmax(y, axis=1)


if __name__ == "__main__":
    # Small shapes consistent with the module: outputsize=8, xdim=ydim=16.
    B, C, H, W, OUT = 2, 3, 16, 16, 8

    key = jax.random.PRNGKey(0)
    k_x, k_cw, k_cb, k_lw, k_lb = jax.random.split(key, 5)

    x = jax.random.normal(k_x, (B, C, H, W), dtype=jnp.float32)

    # Deterministic parameter init (PyTorch-style uniform ranges).
    conv_bound = 1.0 / jnp.sqrt(3.0 * 3.0 * 3.0)
    conv_w = jax.random.uniform(k_cw, (1, C, 3, 3), jnp.float32,
                                -conv_bound, conv_bound)
    conv_b = jax.random.uniform(k_cb, (1,), jnp.float32,
                                -conv_bound, conv_bound)
    lin_bound = 1.0 / jnp.sqrt(float(H * W))
    lin_w = jax.random.uniform(k_lw, (OUT, H * W), jnp.float32,
                               -lin_bound, lin_bound)
    lin_b = jax.random.uniform(k_lb, (OUT,), jnp.float32,
                               -lin_bound, lin_bound)

    # One-time weight preparation (NOT in the per-call hot path).
    w_eff_p, b_eff_p = prepare_params(conv_w, conv_b, lin_w, lin_b, H, W)
    w_eff_p = jax.block_until_ready(w_eff_p)
    b_eff_p = jax.block_until_ready(b_eff_p)

    out = jax.block_until_ready(
        covers_genre_forward(x, w_eff_p, b_eff_p, out_features=OUT))

    ref = jax.block_until_ready(
        reference_forward(x, conv_w, conv_b, lin_w, lin_b))

    assert out.shape == (B, OUT), out.shape
    # bf16 datapath + fold reordering -> loose tolerance vs the f32 reference.
    assert jnp.allclose(out, ref, atol=3e-2, rtol=1e-3), (
        f"max abs err = {jnp.max(jnp.abs(out - ref))}")
    print("KERNEL_OK")
</pallas_src>

<mosaic_0001>
module attributes {stable_mosaic.version = 11 : i64} {
  func.func @covers_genre_kernel(%arg0: i32, %arg1: memref<16x768xbf16, #tpu.memory_space<vmem>>, %arg2: memref<768x128xbf16, #tpu.memory_space<vmem>>, %arg3: memref<1x128xf32, #tpu.memory_space<vmem>>, %arg4: memref<16x128xf32, #tpu.memory_space<vmem>>) attributes {dimension_semantics = [#tpu.dimension_semantics<parallel>], iteration_bounds = array<i64: 1>, scalar_prefetch = 0 : i64, scratch_operands = 0 : i64, tpu.core_type = #tpu.core_type<tc>, window_params = [{transform_indices = @transform_0, window_bounds = array<i64: 16, 768>}, {pipeline_mode = #tpu.pipeline_mode<synchronous>, transform_indices = @transform_1, window_bounds = array<i64: 768, 128>}, {pipeline_mode = #tpu.pipeline_mode<synchronous>, transform_indices = @transform_2, window_bounds = array<i64: 1, 128>}, {transform_indices = @transform_3, window_bounds = array<i64: 16, 128>}]} {
    %c0 = arith.constant 0 : index
    %c0_0 = arith.constant 0 : index
    %0 = vector.load %arg1[%c0, %c0_0] : memref<16x768xbf16, #tpu.memory_space<vmem>>, vector<16x768xbf16>
    %c0_1 = arith.constant 0 : index
    %c0_2 = arith.constant 0 : index
    %1 = vector.load %arg2[%c0_1, %c0_2] : memref<768x128xbf16, #tpu.memory_space<vmem>>, vector<768x128xbf16>
    %cst = arith.constant dense<0.000000e+00> : vector<16x128xf32>
    %2 = tpu.matmul %0, %1, %cst {dimension_numbers = #tpu.dot_dimension_numbers<[1], [0], [0], [1], [0, 0, 1, 1], [], []>} : vector<16x768xbf16>, vector<768x128xbf16>, vector<16x128xf32> -> vector<16x128xf32>
    %c0_3 = arith.constant 0 : index
    %c0_4 = arith.constant 0 : index
    %3 = vector.load %arg3[%c0_3, %c0_4] : memref<1x128xf32, #tpu.memory_space<vmem>>, vector<1x128xf32>
    %4 = vector.broadcast %3 : vector<1x128xf32> to vector<16x128xf32>
    %5 = arith.addf %2, %4 : vector<16x128xf32>
    %cst_5 = arith.constant dense<0xFF800000> : vector<16xf32>
    %6 = vector.multi_reduction <maximumf>, %5, %cst_5 [1] : vector<16x128xf32> to vector<16xf32>
    %7 = vector.shape_cast %6 : vector<16xf32> to vector<16x1xf32>
    %8 = vector.broadcast %7 : vector<16x1xf32> to vector<16x128xf32>
    %9 = arith.subf %5, %8 : vector<16x128xf32>
    %10 = math.exp %9 : vector<16x128xf32>
    %cst_6 = arith.constant dense<0.000000e+00> : vector<16xf32>
    %11 = vector.multi_reduction <add>, %10, %cst_6 [1] : vector<16x128xf32> to vector<16xf32>
    %12 = vector.shape_cast %11 : vector<16xf32> to vector<16x1xf32>
    %13 = math.log %12 : vector<16x1xf32>
    %14 = vector.broadcast %13 : vector<16x1xf32> to vector<16x128xf32>
    %15 = arith.subf %9, %14 : vector<16x128xf32>
    %c0_7 = arith.constant 0 : index
    %c0_8 = arith.constant 0 : index
    %16 = vector.load %arg4[%c0_7, %c0_8] : memref<16x128xf32, #tpu.memory_space<vmem>>, vector<16x128xf32>
    tpu.vector_store %arg4[%c0_7, %c0_8], %15 {strides = array<i32>} : memref<16x128xf32, #tpu.memory_space<vmem>>, vector<16x128xf32>,
    return
  }
  func.func @transform_0(%arg0: i32) -> (i32, i32) {
    %c0_i32 = arith.constant 0 : i32
    %c0_i32_0 = arith.constant 0 : i32
    return %arg0, %c0_i32 : i32, i32
  }
  func.func @transform_1(%arg0: i32) -> (i32, i32) {
    %c0_i32 = arith.constant 0 : i32
    %c0_i32_0 = arith.constant 0 : i32
    %c0_i32_1 = arith.constant 0 : i32
    return %c0_i32, %c0_i32_0 : i32, i32
  }
  func.func @transform_2(%arg0: i32) -> (i32, i32) {
    %c0_i32 = arith.constant 0 : i32
    %c0_i32_0 = arith.constant 0 : i32
    %c0_i32_1 = arith.constant 0 : i32
    return %c0_i32, %c0_i32_0 : i32, i32
  }
  func.func @transform_3(%arg0: i32) -> (i32, i32) {
    %c0_i32 = arith.constant 0 : i32
    %c0_i32_0 = arith.constant 0 : i32
    return %arg0, %c0_i32 : i32, i32
  }
}

</mosaic_0001>

<llo_original>
// kernel: covers_genre_forward.1
$region0: #{covers_genre_forward.1}
  #allocation0 [shape = 'u32[]', space=smem, size = 0x4, offset = 0x4, fixed_abs, tag = 'smem constant byte address 0x4 - core index']
  #allocation1 [shape = 'u32[144,128]{1,0:T(1,128)}', space=vmem, size = 0x12000, scoped, tag = 'internal scratch']
  %s0 = inlined_call_operand.vmem [shape: bf16[16,768], index: 0, kind: input, shape index: {}]
  %s1 = inlined_call_operand.hbm [shape: bf16[768,128], index: 1, kind: input, shape index: {}]
  %s2 = inlined_call_operand.vmem [shape: f32[1,128], index: 2, kind: input, shape index: {}]
  %s3 = inlined_call_operand.vmem [shape: f32[16,128], index: 3, kind: output, shape index: {}]
  %s4 = sld [smem:[#allocation0]]
  $region26: #{covers_genre_forward.1} parent=0
    _
  %s6 = ssub.s32 1, %s4
  %s7 = scalar_select 0, %s6, %s4
  $region1: #{covers_genre_forward.1} parent=0
    #allocation2 [shape = 'u8[196608]{0}', space=vmem, size = 0x30000, scoped, tag = 'input window, operand 1, single buffered']
    #allocation3 [shape = 's32[1]{0}', space=sflag, size = 0x4, scoped, tag = 'scoped memory for covers_genre_forward.1']
    %8 = vsyncpa [#allocation3], 0
    // Predicated region
    $region2: #{covers_genre_forward.1} parent=1 // pred_check
      _
    $region3: #{covers_genre_forward.1} parent=1 // pred_check_branch
      %10 = sbr.rel (0) target = $region5
    $region4: #{covers_genre_forward.1} parent=1 // pred_region
      _
    $region5: #{covers_genre_forward.1} parent=1 // pred_fallthru
      _
    // Predicated region
    $region6: #{covers_genre_forward.1} parent=1 // pred_check
      _
    $region7: #{covers_genre_forward.1} parent=1 // pred_check_branch
      %12 = sbr.rel (0) target = $region9
    $region8: #{covers_genre_forward.1} parent=1 // pred_region
      %s14 = ssub.s32 6144, 6144
      %15 = vsyncadd [#allocation3], %s14
      %s16 = sshll.u32 [#allocation2], 4
      %s17 = int_to_ptr.vmem [resolvable:$true] %s16
      %22 = dma.hbm_to_vmem [thread:$0]  %s1, 6144, %s17, [#allocation3], 64, 64, 4
    $region9: #{covers_genre_forward.1} parent=1 // pred_fallthru
      _
    // Predicated region
    $region10: #{covers_genre_forward.1} parent=1 // pred_check
      _
    $region11: #{covers_genre_forward.1} parent=1 // pred_check_branch
      %24 = sbr.rel (0) target = $region13
    $region12: #{covers_genre_forward.1} parent=1 // pred_region
      _
    $region13: #{covers_genre_forward.1} parent=1 // pred_fallthru
      _
    // Predicated region
    $region14: #{covers_genre_forward.1} parent=1 // pred_check
      _
    $region15: #{covers_genre_forward.1} parent=1 // pred_check_branch
      %26 = sbr.rel (0) target = $region17
    $region16: #{covers_genre_forward.1} parent=1 // pred_region
      %27 = dma.done [#allocation3], 6144
    $region17: #{covers_genre_forward.1} parent=1 // pred_fallthru
      _
    %v29 = vld [vmem:[%s0] sm:$0xff]
    %v30 = vld [vmem:[%s0 + $0x8] sm:$0xff]
    %v31 = vld [vmem:[%s0 + $0x10] sm:$0xff]
    %v32 = vld [vmem:[%s0 + $0x18] sm:$0xff]
    %v33 = vld [vmem:[%s0 + $0x20] sm:$0xff]
    %v34 = vld [vmem:[%s0 + $0x28] sm:$0xff]
    %v35 = vld [vmem:[#allocation2] sm:$0xf]
    %v36 = vld [vmem:[#allocation2 + $0x4] sm:$0xf]
    %v37 = vld [vmem:[#allocation2 + $0x8] sm:$0xf]
    %v38 = vld [vmem:[#allocation2 + $0xc] sm:$0xf]
    %v39 = vld [vmem:[#allocation2 + $0x10] sm:$0xf]
    %v40 = vld [vmem:[#allocation2 + $0x14] sm:$0xf]
    %v41 = vld [vmem:[#allocation2 + $0x18] sm:$0xf]
    %v42 = vld [vmem:[#allocation2 + $0x1c] sm:$0xf]
    %v43 = vld [vmem:[#allocation2 + $0x20] sm:$0xf]
    %v44 = vld [vmem:[#allocation2 + $0x24] sm:$0xf]
    %v45 = vld [vmem:[#allocation2 + $0x28] sm:$0xf]
    %v46 = vld [vmem:[#allocation2 + $0x2c] sm:$0xf]
    %v47 = vld [vmem:[#allocation2 + $0x30] sm:$0xf]
    %v48 = vld [vmem:[#allocation2 + $0x34] sm:$0xf]
    %v49 = vld [vmem:[#allocation2 + $0x38] sm:$0xf]
    %v50 = vld [vmem:[#allocation2 + $0x3c] sm:$0xf]
    %v51 = vld [vmem:[#allocation2 + $0x40] sm:$0xf]
    %v52 = vld [vmem:[#allocation2 + $0x44] sm:$0xf]
    %v53 = vld [vmem:[#allocation2 + $0x48] sm:$0xf]
    %v54 = vld [vmem:[#allocation2 + $0x4c] sm:$0xf]
    %v55 = vld [vmem:[#allocation2 + $0x50] sm:$0xf]
    %v56 = vld [vmem:[#allocation2 + $0x54] sm:$0xf]
    %v57 = vld [vmem:[#allocation2 + $0x58] sm:$0xf]
    %v58 = vld [vmem:[#allocation2 + $0x5c] sm:$0xf]
    %v59 = vld [vmem:[#allocation2 + $0x60] sm:$0xf]
    %v60 = vld [vmem:[#allocation2 + $0x64] sm:$0xf]
    %v61 = vld [vmem:[#allocation2 + $0x68] sm:$0xf]
    %v62 = vld [vmem:[#allocation2 + $0x6c] sm:$0xf]
    %v63 = vld [vmem:[#allocation2 + $0x70] sm:$0xf]
    %v64 = vld [vmem:[#allocation2 + $0x74] sm:$0xf]
    %v65 = vld [vmem:[#allocation2 + $0x78] sm:$0xf]
    %v66 = vld [vmem:[#allocation2 + $0x7c] sm:$0xf]
    %v67 = vld [vmem:[#allocation2 + $0x80] sm:$0xf]
    %v68 = vld [vmem:[#allocation2 + $0x84] sm:$0xf]
    %v69 = vld [vmem:[#allocation2 + $0x88] sm:$0xf]
    %v70 = vld [vmem:[#allocation2 + $0x8c] sm:$0xf]
    %v71 = vld [vmem:[#allocation2 + $0x90] sm:$0xf]
    %v72 = vld [vmem:[#allocation2 + $0x94] sm:$0xf]
    %v73 = vld [vmem:[#allocation2 + $0x98] sm:$0xf]
    %v74 = vld [vmem:[#allocation2 + $0x9c] sm:$0xf]
    %v75 = vld [vmem:[#allocation2 + $0xa0] sm:$0xf]
    %v76 = vld [vmem:[#allocation2 + $0xa4] sm:$0xf]
    %v77 = vld [vmem:[#allocation2 + $0xa8] sm:$0xf]
    %v78 = vld [vmem:[#allocation2 + $0xac] sm:$0xf]
    %v79 = vld [vmem:[#allocation2 + $0xb0] sm:$0xf]
    %v80 = vld [vmem:[#allocation2 + $0xb4] sm:$0xf]
    %v81 = vld [vmem:[#allocation2 + $0xb8] sm:$0xf]
    %v82 = vld [vmem:[#allocation2 + $0xbc] sm:$0xf]
    %v83 = vld [vmem:[#allocation2 + $0xc0] sm:$0xf]
    %v84 = vld [vmem:[#allocation2 + $0xc4] sm:$0xf]
    %v85 = vld [vmem:[#allocation2 + $0xc8] sm:$0xf]
    %v86 = vld [vmem:[#allocation2 + $0xcc] sm:$0xf]
    %v87 = vld [vmem:[#allocation2 + $0xd0] sm:$0xf]
    %v88 = vld [vmem:[#allocation2 + $0xd4] sm:$0xf]
    %v89 = vld [vmem:[#allocation2 + $0xd8] sm:$0xf]
    %v90 = vld [vmem:[#allocation2 + $0xdc] sm:$0xf]
    %v91 = vld [vmem:[#allocation2 + $0xe0] sm:$0xf]
    %v92 = vld [vmem:[#allocation2 + $0xe4] sm:$0xf]
    %v93 = vld [vmem:[#allocation2 + $0xe8] sm:$0xf]
    %v94 = vld [vmem:[#allocation2 + $0xec] sm:$0xf]
    %v95 = vld [vmem:[#allocation2 + $0xf0] sm:$0xf]
    %v96 = vld [vmem:[#allocation2 + $0xf4] sm:$0xf]
    %v97 = vld [vmem:[#allocation2 + $0xf8] sm:$0xf]
    %v98 = vld [vmem:[#allocation2 + $0xfc] sm:$0xf]
    %v99 = vld [vmem:[#allocation2 + $0x100] sm:$0xf]
    %v100 = vld [vmem:[#allocation2 + $0x104] sm:$0xf]
    %v101 = vld [vmem:[#allocation2 + $0x108] sm:$0xf]
    %v102 = vld [vmem:[#allocation2 + $0x10c] sm:$0xf]
    %v103 = vld [vmem:[#allocation2 + $0x110] sm:$0xf]
    %v104 = vld [vmem:[#allocation2 + $0x114] sm:$0xf]
    %v105 = vld [vmem:[#allocation2 + $0x118] sm:$0xf]
    %v106 = vld [vmem:[#allocation2 + $0x11c] sm:$0xf]
    %v107 = vld [vmem:[#allocation2 + $0x120] sm:$0xf]
    %v108 = vld [vmem:[#allocation2 + $0x124] sm:$0xf]
    %v109 = vld [vmem:[#allocation2 + $0x128] sm:$0xf]
    %v110 = vld [vmem:[#allocation2 + $0x12c] sm:$0xf]
    %v111 = vld [vmem:[#allocation2 + $0x130] sm:$0xf]
    %v112 = vld [vmem:[#allocation2 + $0x134] sm:$0xf]
    %v113 = vld [vmem:[#allocation2 + $0x138] sm:$0xf]
    %v114 = vld [vmem:[#allocation2 + $0x13c] sm:$0xf]
    %v115 = vld [vmem:[#allocation2 + $0x140] sm:$0xf]
    %v116 = vld [vmem:[#allocation2 + $0x144] sm:$0xf]
    %v117 = vld [vmem:[#allocation2 + $0x148] sm:$0xf]
    %v118 = vld [vmem:[#allocation2 + $0x14c] sm:$0xf]
    %v119 = vld [vmem:[#allocation2 + $0x150] sm:$0xf]
    %v120 = vld [vmem:[#allocation2 + $0x154] sm:$0xf]
    %v121 = vld [vmem:[#allocation2 + $0x158] sm:$0xf]
    %v122 = vld [vmem:[#allocation2 + $0x15c] sm:$0xf]
    %v123 = vld [vmem:[#allocation2 + $0x160] sm:$0xf]
    %v124 = vld [vmem:[#allocation2 + $0x164] sm:$0xf]
    %v125 = vld [vmem:[#allocation2 + $0x168] sm:$0xf]
    %v126 = vld [vmem:[#allocation2 + $0x16c] sm:$0xf]
    %v127 = vld [vmem:[#allocation2 + $0x170] sm:$0xf]
    %v128 = vld [vmem:[#allocation2 + $0x174] sm:$0xf]
    %v129 = vld [vmem:[#allocation2 + $0x178] sm:$0xf]
    %v130 = vld [vmem:[#allocation2 + $0x17c] sm:$0xf]
    %v131 = vld [vmem:[%s2] sm:$0x1]
    %v133 = vlaneseq
    %v134 = vshrl.u32 %v133, 7
    %v135 = vsub.s32 0, %v134
    %v136 = vrot.slane %v131, %v135
    %v144 = vunpack.c.l.b16 %v29
    %v145 = vunpack.c.h.b16 %v29
    %v146 = vunpack.c.l.b16 %v30
    %v147 = vunpack.c.h.b16 %v30
    %v148 = vunpack.c.l.b16 %v31
    %v149 = vunpack.c.h.b16 %v31
    %v150 = vunpack.c.l.b16 %v32
    %v151 = vunpack.c.h.b16 %v32
    %v152 = vunpack.c.l.b16 %v33
    %v153 = vunpack.c.h.b16 %v33
    %v154 = vunpack.c.l.b16 %v34
    %v155 = vunpack.c.h.b16 %v34
    %v156 = vpack.c.b16 %v150, %v144
    %v157 = vpack.c.b16 %v151, %v145
    %v158 = vpack.c.b16 %v152, %v146
    %v159 = vpack.c.b16 %v153, %v147
    %v160 = vpack.c.b16 %v154, %v148
    %v161 = vpack.c.b16 %v155, %v149
    %v264 = vunpack.c.l.b16 %v35
    %v265 = vunpack.c.l.b16 %v36
    %v266 = vunpack.c.l.b16 %v37
    %v267 = vunpack.c.l.b16 %v38
    %v268 = vunpack.c.l.b16 %v39
    %v269 = vunpack.c.l.b16 %v40
    %v270 = vunpack.c.l.b16 %v41
    %v271 = vunpack.c.l.b16 %v42
    %v272 = vunpack.c.l.b16 %v43
    %v273 = vunpack.c.l.b16 %v44
    %v274 = vunpack.c.l.b16 %v45
    %v275 = vunpack.c.l.b16 %v46
    %v276 = vunpack.c.l.b16 %v47
    %v277 = vunpack.c.l.b16 %v48
    %v278 = vunpack.c.l.b16 %v49
    %v279 = vunpack.c.l.b16 %v50
    %v280 = vunpack.c.l.b16 %v51
    %v281 = vunpack.c.l.b16 %v52
    %v282 = vunpack.c.l.b16 %v53
    %v283 = vunpack.c.l.b16 %v54
    %v284 = vunpack.c.l.b16 %v55
    %v285 = vunpack.c.l.b16 %v56
    %v286 = vunpack.c.l.b16 %v57
    %v287 = vunpack.c.l.b16 %v58
    %v288 = vunpack.c.l.b16 %v59
    %v289 = vunpack.c.l.b16 %v60
    %v290 = vunpack.c.l.b16 %v61
    %v291 = vunpack.c.l.b16 %v62
    %v292 = vunpack.c.l.b16 %v63
    %v293 = vunpack.c.l.b16 %v64
    %v294 = vunpack.c.l.b16 %v65
    %v295 = vunpack.c.l.b16 %v66
    %v296 = vunpack.c.l.b16 %v67
    %v297 = vunpack.c.l.b16 %v68
    %v298 = vunpack.c.l.b16 %v69
    %v299 = vunpack.c.l.b16 %v70
    %v300 = vunpack.c.l.b16 %v71
    %v301 = vunpack.c.l.b16 %v72
    %v302 = vunpack.c.l.b16 %v73
    %v303 = vunpack.c.l.b16 %v74
    %v304 = vunpack.c.l.b16 %v75
    %v305 = vunpack.c.l.b16 %v76
    %v306 = vunpack.c.l.b16 %v77
    %v307 = vunpack.c.l.b16 %v78
    %v308 = vunpack.c.l.b16 %v79
    %v309 = vunpack.c.l.b16 %v80
    %v310 = vunpack.c.l.b16 %v81
    %v311 = vunpack.c.l.b16 %v82
    %v312 = vunpack.c.l.b16 %v83
    %v313 = vunpack.c.l.b16 %v84
    %v314 = vunpack.c.l.b16 %v85
    %v315 = vunpack.c.l.b16 %v86
    %v316 = vunpack.c.l.b16 %v87
    %v317 = vunpack.c.l.b16 %v88
    %v318 = vunpack.c.l.b16 %v89
    %v319 = vunpack.c.l.b16 %v90
    %v320 = vunpack.c.l.b16 %v91
    %v321 = vunpack.c.l.b16 %v92
    %v322 = vunpack.c.l.b16 %v93
    %v323 = vunpack.c.l.b16 %v94
    %v324 = vunpack.c.l.b16 %v95
    %v325 = vunpack.c.l.b16 %v96
    %v326 = vunpack.c.l.b16 %v97
    %v327 = vunpack.c.l.b16 %v98
    %v328 = vunpack.c.l.b16 %v99
    %v329 = vunpack.c.l.b16 %v100
    %v330 = vunpack.c.l.b16 %v101
    %v331 = vunpack.c.l.b16 %v102
    %v332 = vunpack.c.l.b16 %v103
    %v333 = vunpack.c.l.b16 %v104
    %v334 = vunpack.c.l.b16 %v105
    %v335 = vunpack.c.l.b16 %v106
    %v336 = vunpack.c.l.b16 %v107
    %v337 = vunpack.c.l.b16 %v108
    %v338 = vunpack.c.l.b16 %v109
    %v339 = vunpack.c.l.b16 %v110
    %v340 = vunpack.c.l.b16 %v111
    %v341 = vunpack.c.l.b16 %v112
    %v342 = vunpack.c.l.b16 %v113
    %v343 = vunpack.c.l.b16 %v114
    %v344 = vunpack.c.l.b16 %v115
    %v345 = vunpack.c.l.b16 %v116
    %v346 = vunpack.c.l.b16 %v117
    %v347 = vunpack.c.l.b16 %v118
    %v348 = vunpack.c.l.b16 %v119
    %v349 = vunpack.c.l.b16 %v120
    %v350 = vunpack.c.l.b16 %v121
    %v351 = vunpack.c.l.b16 %v122
    %v352 = vunpack.c.l.b16 %v123
    %v353 = vunpack.c.l.b16 %v124
    %v354 = vunpack.c.l.b16 %v125
    %v355 = vunpack.c.l.b16 %v126
    %v356 = vunpack.c.l.b16 %v127
    %v357 = vunpack.c.l.b16 %v128
    %v358 = vunpack.c.l.b16 %v129
    %v359 = vunpack.c.l.b16 %v130
    %v360 = vpack.c.b16 %v265, %v264
    %v361 = vpack.c.b16 %v267, %v266
    %v362 = vpack.c.b16 %v269, %v268
    %v363 = vpack.c.b16 %v271, %v270
    %v364 = vpack.c.b16 %v273, %v272
    %v365 = vpack.c.b16 %v275, %v274
    %v366 = vpack.c.b16 %v277, %v276
    %v367 = vpack.c.b16 %v279, %v278
    %v368 = vpack.c.b16 %v281, %v280
    %v369 = vpack.c.b16 %v283, %v282
    %v370 = vpack.c.b16 %v285, %v284
    %v371 = vpack.c.b16 %v287, %v286
    %v372 = vpack.c.b16 %v289, %v288
    %v373 = vpack.c.b16 %v291, %v290
    %v374 = vpack.c.b16 %v293, %v292
    %v375 = vpack.c.b16 %v295, %v294
    %v376 = vpack.c.b16 %v297, %v296
    %v377 = vpack.c.b16 %v299, %v298
    %v378 = vpack.c.b16 %v301, %v300
    %v379 = vpack.c.b16 %v303, %v302
    %v380 = vpack.c.b16 %v305, %v304
    %v381 = vpack.c.b16 %v307, %v306
    %v382 = vpack.c.b16 %v309, %v308
    %v383 = vpack.c.b16 %v311, %v310
    %v384 = vpack.c.b16 %v313, %v312
    %v385 = vpack.c.b16 %v315, %v314
    %v386 = vpack.c.b16 %v317, %v316
    %v387 = vpack.c.b16 %v319, %v318
    %v388 = vpack.c.b16 %v321, %v320
    %v389 = vpack.c.b16 %v323, %v322
    %v390 = vpack.c.b16 %v325, %v324
    %v391 = vpack.c.b16 %v327, %v326
    %v392 = vpack.c.b16 %v329, %v328
    %v393 = vpack.c.b16 %v331, %v330
    %v394 = vpack.c.b16 %v333, %v332
    %v395 = vpack.c.b16 %v335, %v334
    %v396 = vpack.c.b16 %v337, %v336
    %v397 = vpack.c.b16 %v339, %v338
    %v398 = vpack.c.b16 %v341, %v340
    %v399 = vpack.c.b16 %v343, %v342
    %v400 = vpack.c.b16 %v345, %v344
    %v401 = vpack.c.b16 %v347, %v346
    %v402 = vpack.c.b16 %v349, %v348
    %v403 = vpack.c.b16 %v351, %v350
    %v404 = vpack.c.b16 %v353, %v352
    %v405 = vpack.c.b16 %v355, %v354
    %v406 = vpack.c.b16 %v357, %v356
    %v407 = vpack.c.b16 %v359, %v358
    %456 = vmatprep.subr.bf16.mxu0 0
    %457 = vmatpush1.bf16.msra.mxu0 %v360
    %458 = vmatprep.subr.bf16.mxu0 0
    %459 = vmatpush1.bf16.msra.mxu0 %v361
    %460 = vmatprep.subr.bf16.mxu0 0
    %461 = vmatpush1.bf16.msra.mxu0 %v362
    %462 = vmatprep.subr.bf16.mxu0 0
    %463 = vmatpush1.bf16.msra.mxu0 %v363
    %464 = vmatprep.subr.bf16.mxu0 0
    %465 = vmatpush1.bf16.msra.mxu0 %v364
    %466 = vmatprep.subr.bf16.mxu0 0
    %467 = vmatpush1.bf16.msra.mxu0 %v365
    %468 = vmatprep.subr.bf16.mxu0 0
    %469 = vmatpush1.bf16.msra.mxu0 %v366
    %470 = vmatprep.subr.bf16.mxu0 0
    %471 = vmatpush1.bf16.msra.mxu0 %v367
    %472 = vmatprep.subr.bf16.mxu0 0
    %473 = vmatpush1.bf16.msra.mxu0 %v368
    %474 = vmatprep.subr.bf16.mxu0 0
    %475 = vmatpush1.bf16.msra.mxu0 %v369
    %476 = vmatprep.subr.bf16.mxu0 0
    %477 = vmatpush1.bf16.msra.mxu0 %v370
    %478 = vmatprep.subr.bf16.mxu0 0
    %479 = vmatpush1.bf16.msra.mxu0 %v371
    %480 = vmatprep.subr.bf16.mxu0 0
    %481 = vmatpush1.bf16.msra.mxu0 %v372
    %482 = vmatprep.subr.bf16.mxu0 0
    %483 = vmatpush1.bf16.msra.mxu0 %v373
    %484 = vmatprep.subr.bf16.mxu0 0
    %485 = vmatpush1.bf16.msra.mxu0 %v374
    %486 = vmatprep.subr.bf16.mxu0 0
    %487 = vmatpush1.bf16.msra.mxu0 %v375
    %488 = vmatprep.mubr.bf16.mxu0 %v157
    %489 = vmatmul.mubr.bf16.gmra.mrb[0].mxu0 %v156
    %v490 = vpop.f32.mrb[0].mxu0
    %v491 = vadd.f32 %v136, %v490
    %v492 = vpop.f32.mrb[0].mxu0
    %v493 = vpop.f32.mrb[0].mxu0
    %v494 = vadd.f32 %v136, %v493
    %v495 = vpop.f32.mrb[0].mxu0
    %496 = vdwg.mxu0
    %497 = vmatprep.subr.bf16.mxu0 0
    %498 = vmatpush1.bf16.msra.mxu0 %v376
    %499 = vmatprep.subr.bf16.mxu0 0
    %500 = vmatpush1.bf16.msra.mxu0 %v377
    %501 = vmatprep.subr.bf16.mxu0 0
    %502 = vmatpush1.bf16.msra.mxu0 %v378
    %503 = vmatprep.subr.bf16.mxu0 0
    %504 = vmatpush1.bf16.msra.mxu0 %v379
    %505 = vmatprep.subr.bf16.mxu0 0
    %506 = vmatpush1.bf16.msra.mxu0 %v380
    %507 = vmatprep.subr.bf16.mxu0 0
    %508 = vmatpush1.bf16.msra.mxu0 %v381
    %509 = vmatprep.subr.bf16.mxu0 0
    %510 = vmatpush1.bf16.msra.mxu0 %v382
    %511 = vmatprep.subr.bf16.mxu0 0
    %512 = vmatpush1.bf16.msra.mxu0 %v383
    %513 = vmatprep.subr.bf16.mxu0 0
    %514 = vmatpush1.bf16.msra.mxu0 %v384
    %515 = vmatprep.subr.bf16.mxu0 0
    %516 = vmatpush1.bf16.msra.mxu0 %v385
    %517 = vmatprep.subr.bf16.mxu0 0
    %518 = vmatpush1.bf16.msra.mxu0 %v386
    %519 = vmatprep.subr.bf16.mxu0 0
    %520 = vmatpush1.bf16.msra.mxu0 %v387
    %521 = vmatprep.subr.bf16.mxu0 0
    %522 = vmatpush1.bf16.msra.mxu0 %v388
    %523 = vmatprep.subr.bf16.mxu0 0
    %524 = vmatpush1.bf16.msra.mxu0 %v389
    %525 = vmatprep.subr.bf16.mxu0 0
    %526 = vmatpush1.bf16.msra.mxu0 %v390
    %527 = vmatprep.subr.bf16.mxu0 0
    %528 = vmatpush1.bf16.msra.mxu0 %v391
    %529 = vmatprep.mubr.bf16.mxu0 %v159
    %530 = vmatmul.mubr.bf16.gmra.mrb[0].mxu0 %v158
    %v531 = vpop.f32.mrb[0].mxu0
    %v532 = vadd.f32 %v491, %v531
    %v533 = vpop.f32.mrb[0].mxu0
    %v534 = vpop.f32.mrb[0].mxu0
    %v535 = vadd.f32 %v494, %v534
    %v536 = vpop.f32.mrb[0].mxu0
    %537 = vdwg.mxu0
    %538 = vmatprep.subr.bf16.mxu0 0
    %539 = vmatpush1.bf16.msra.mxu0 %v392
    %540 = vmatprep.subr.bf16.mxu0 0
    %541 = vmatpush1.bf16.msra.mxu0 %v393
    %542 = vmatprep.subr.bf16.mxu0 0
    %543 = vmatpush1.bf16.msra.mxu0 %v394
    %544 = vmatprep.subr.bf16.mxu0 0
    %545 = vmatpush1.bf16.msra.mxu0 %v395
    %546 = vmatprep.subr.bf16.mxu0 0
    %547 = vmatpush1.bf16.msra.mxu0 %v396
    %548 = vmatprep.subr.bf16.mxu0 0
    %549 = vmatpush1.bf16.msra.mxu0 %v397
    %550 = vmatprep.subr.bf16.mxu0 0
    %551 = vmatpush1.bf16.msra.mxu0 %v398
    %552 = vmatprep.subr.bf16.mxu0 0
    %553 = vmatpush1.bf16.msra.mxu0 %v399
    %554 = vmatprep.subr.bf16.mxu0 0
    %555 = vmatpush1.bf16.msra.mxu0 %v400
    %556 = vmatprep.subr.bf16.mxu0 0
    %557 = vmatpush1.bf16.msra.mxu0 %v401
    %558 = vmatprep.subr.bf16.mxu0 0
    %559 = vmatpush1.bf16.msra.mxu0 %v402
    %560 = vmatprep.subr.bf16.mxu0 0
    %561 = vmatpush1.bf16.msra.mxu0 %v403
    %562 = vmatprep.subr.bf16.mxu0 0
    %563 = vmatpush1.bf16.msra.mxu0 %v404
    %564 = vmatprep.subr.bf16.mxu0 0
    %565 = vmatpush1.bf16.msra.mxu0 %v405
    %566 = vmatprep.subr.bf16.mxu0 0
    %567 = vmatpush1.bf16.msra.mxu0 %v406
    %568 = vmatprep.subr.bf16.mxu0 0
    %569 = vmatpush1.bf16.msra.mxu0 %v407
    %570 = vmatprep.mubr.bf16.mxu0 %v161
    %571 = vmatmul.mubr.bf16.gmra.mrb[0].mxu0 %v160
    %v572 = vpop.f32.mrb[0].mxu0
    %v573 = vadd.f32 %v532, %v572
    %v574 = vpop.f32.mrb[0].mxu0
    %v575 = vpop.f32.mrb[0].mxu0
    %v576 = vadd.f32 %v535, %v575
    %v577 = vpop.f32.mrb[0].mxu0
    %578 = vdwg.mxu0
    %579 = vmax.xlane.f32.xlu0 %v573
    %v580 = vpop.xlane.xlu0 %579
    %581 = vmax.xlane.f32.xlu0 %v576
    %v582 = vpop.xlane.xlu0 %581
    %v583 = vsub.f32 %v573, %v580
    %v584 = vsub.f32 %v576, %v582
    %v585 = vmul.f32 %v583, 1.442695
    %v586 = vpow.pop %v585
    %v587 = vmul.f32 %v584, 1.442695
    %v588 = vpow.pop %v587
    %589 = vadd.xlane.f32.xlu0 %v586
    %v590 = vpop.xlane.xlu0 %589
    %591 = vadd.xlane.f32.xlu0 %v588
    %v592 = vpop.xlane.xlu0 %591
    %v593 = vlog2.pop %v590
    %v594 = vmul.f32 %v593, 0.6931472
    %v595 = vlog2.pop %v592
    %v596 = vmul.f32 %v595, 0.6931472
    %v597 = vsub.f32 %v583, %v594
    %v598 = vsub.f32 %v584, %v596
    %599 = vst [vmem:[%s3] sm:$0xff] %v597
    %600 = vst [vmem:[%s3 + $0x8] sm:$0xff] %v598
    // Predicated region
    $region18: #{covers_genre_forward.1} parent=1 // pred_check
      _
    $region19: #{covers_genre_forward.1} parent=1 // pred_check_branch
      %602 = sbr.rel (0) target = $region21
    $region20: #{covers_genre_forward.1} parent=1 // pred_region
      _
    $region21: #{covers_genre_forward.1} parent=1 // pred_fallthru
      _
    // Predicated region
    $region22: #{covers_genre_forward.1} parent=1 // pred_check
      _
    $region23: #{covers_genre_forward.1} parent=1 // pred_check_branch
      %604 = sbr.rel (0) target = $region25
    $region24: #{covers_genre_forward.1} parent=1 // pred_region
      _
    $region25: #{covers_genre_forward.1} parent=1 // pred_fallthru
      _
    %605 = vsyncpa [#allocation3], 1

</llo_original>
